<compile_context>
chip_gen: v7x
topology: tpu7x:2x2x1
jax: 0.10.0
libtpu: 0.0.40
codegen_flags: <defaults>
</compile_context>

<pallas_src>
import jax
import jax.numpy as jnp
from jax.experimental import pallas as pl
from jax.experimental.pallas import tpu as pltpu

PACK = 16            # samples packed per 128-lane row
FEAT = 8             # input features per sample
LANE = PACK * FEAT   # 128


def _round_up(v, m):
    return ((v + m - 1) // m) * m


def _mlp_kernel(x_ref, w1_ref, w2_ref, w3_ref, w4_ref, b_ref, b4_ref, o_ref):
    """Whole 4-layer MLP on one (tm_rows, 128) packed batch tile.

    Each 128-lane row carries 16 independent samples (8 features each); the
    block-diagonal weights guarantee samples never mix.
    """
    h = x_ref[...]                                                    # (tm, 128)

    # layer 1 (8 -> 6 inside each 8-lane group) + LogSigmoid
    h = jnp.dot(h, w1_ref[...], preferred_element_type=jnp.float32) + b_ref[0:1, :]
    h = jax.nn.log_sigmoid(h)

    # layer 2 (6 -> 4) + LogSigmoid
    h = jnp.dot(h, w2_ref[...], preferred_element_type=jnp.float32) + b_ref[1:2, :]
    h = jax.nn.log_sigmoid(h)

    # layer 3 (4 -> 2) + LogSigmoid
    h = jnp.dot(h, w3_ref[...], preferred_element_type=jnp.float32) + b_ref[2:3, :]
    h = jax.nn.log_sigmoid(h)

    # layer 4 (2 -> 1): one output lane per packed sample, + scalar bias, Sigmoid
    h = jnp.dot(h, w4_ref[...], preferred_element_type=jnp.float32) + b4_ref[0]
    o_ref[...] = jax.nn.sigmoid(h)                                    # (tm, 16)


def _padded_block(w_t):
    """(in,out) weight zero-padded into an (8,8) block (zero pad rows/cols)."""
    blk = jnp.zeros((FEAT, FEAT), jnp.float32)
    return blk.at[: w_t.shape[0], : w_t.shape[1]].set(w_t.astype(jnp.float32))


def _block_diag16(w_t):
    """Repeat the zero-padded (8,8) block on 16 diagonal blocks -> (128,128)."""
    return jnp.kron(jnp.eye(PACK, dtype=jnp.float32), _padded_block(w_t))


def _w4_packed(w4):
    """torch (1,2) weight -> (128,16): output lane s belongs to packed sample s."""
    col = jnp.zeros((FEAT, 1), jnp.float32).at[:2, 0].set(w4[0].astype(jnp.float32))
    return jnp.kron(jnp.eye(PACK, dtype=jnp.float32), col)            # (128, 16)


def _pack_biases(b1, b2, b3):
    """Biases of layers 1..3, each zero-padded to 8 lanes and tiled 16x -> (8,128)."""
    def row(b):
        r = jnp.zeros((FEAT,), jnp.float32).at[: b.shape[0]].set(b.astype(jnp.float32))
        return jnp.tile(r, PACK)                                      # (128,)
    bp = jnp.zeros((8, LANE), jnp.float32)
    return bp.at[0].set(row(b1)).at[1].set(row(b2)).at[2].set(row(b3))


def multilayer_forward(x, params, *, tm=65536):
    """x: (N, 8) float32.  Returns (N, 1) float32 (sigmoid probabilities)."""
    n, in_dim = x.shape
    assert in_dim == FEAT, "Multilayer expects 8 input features"
    x = x.astype(jnp.float32)
    (w1, b1), (w2, b2), (w3, b3), (w4, b4) = params

    # ---- pack 16 samples per 128-lane row; only ragged batches get a tail pad
    n_pad = max(_round_up(n, PACK), LANE)   # min 128 so packed rows >= 8
    if n_pad != n:
        x = jnp.pad(x, ((0, n_pad - n), (0, 0)))
    rows = n_pad // PACK
    xp = x.reshape(rows, LANE)              # pure row-major repack

    # ---- tile size in packed rows: big tiles, but keep >=2 grid steps (v7x)
    tm_rows = max(8, _round_up(max(tm // PACK, 1), 8))
    cap = _round_up(max((rows + 1) // 2, 8), 8)
    tm_rows = min(tm_rows, cap)
    grid = -(-rows // tm_rows)
    rows_out = grid * tm_rows               # extra OUTPUT rows only (no input copy)

    # ---- weight / bias prep (block-diagonal packing; zero-fill invariant)
    w1_bd = _block_diag16(w1.T)             # (128, 128)
    w2_bd = _block_diag16(w2.T)
    w3_bd = _block_diag16(w3.T)
    w4_pk = _w4_packed(w4)                  # (128, 16)
    b123 = _pack_biases(b1, b2, b3)         # (8, 128)
    b4_s = jnp.asarray(b4, jnp.float32).reshape(1)   # SMEM scalar

    rowb = lambda i: (i, 0)   # batch-tiled arrays
    full = lambda i: (0, 0)   # grid-invariant weights / biases

    out = pl.pallas_call(
        _mlp_kernel,
        out_shape=jax.ShapeDtypeStruct((rows_out, PACK), jnp.float32),
        grid_spec=pl.GridSpec(
            grid=(grid,),
            in_specs=[
                pl.BlockSpec((tm_rows, LANE), rowb),      # packed activations
                pl.BlockSpec((LANE, LANE), full),         # W1 block-diagonal
                pl.BlockSpec((LANE, LANE), full),         # W2 block-diagonal
                pl.BlockSpec((LANE, LANE), full),         # W3 block-diagonal
                pl.BlockSpec((LANE, PACK), full),         # W4 (one lane / sample)
                pl.BlockSpec((8, LANE), full),            # biases 1..3 (lane-tiled)
                pl.BlockSpec(memory_space=pltpu.MemorySpace.SMEM),  # bias 4 scalar
            ],
            out_specs=pl.BlockSpec((tm_rows, PACK), rowb),
        ),
        compiler_params=pltpu.CompilerParams(
            dimension_semantics=("parallel",)),
    )(xp, w1_bd, w2_bd, w3_bd, w4_pk, b123, b4_s)

    # lane s of packed row r is sample 16*r + s  ->  plain row-major unpack.
    return out.reshape(rows_out * PACK, 1)[:n]


def init_params(key):
    """Deterministic init mirroring torch.nn.Linear shapes (out, in)."""
    dims = [(6, 8), (4, 6), (2, 4), (1, 2)]
    params = []
    for (out_d, in_d) in dims:
        key, kw, kb = jax.random.split(key, 3)
        bound = 1.0 / (in_d ** 0.5)
        w = jax.random.uniform(kw, (out_d, in_d), jnp.float32, -bound, bound)
        b = jax.random.uniform(kb, (out_d,), jnp.float32, -bound, bound)
        params.append((w, b))
    return params


def reference_forward(x, params):
    """Pure-JAX reference for a sanity check."""
    (w1, b1), (w2, b2), (w3, b3), (w4, b4) = params
    h = jax.nn.log_sigmoid(x @ w1.T + b1)
    h = jax.nn.log_sigmoid(h @ w2.T + b2)
    h = jax.nn.log_sigmoid(h @ w3.T + b3)
    return jax.nn.sigmoid(h @ w4.T + b4)


if __name__ == "__main__":
    key = jax.random.PRNGKey(0)
    key, kx1, kx2, kx3 = jax.random.split(key, 4)
    params = init_params(key)

    # Small batch of synthetic "diabetes-like" feature rows: exactly one packed row.
    x1 = jax.random.normal(kx1, (16, FEAT), dtype=jnp.float32)
    o1 = jax.block_until_ready(multilayer_forward(x1, params))
    r1 = reference_forward(x1, params)
    assert o1.shape == (16, 1)
    assert jnp.allclose(o1, r1, atol=1e-5, rtol=1e-5), "mismatch vs reference (16)"

    # Ragged batch (not a multiple of 16): exercises the tail-padding path.
    x2 = jax.random.normal(kx2, (70, FEAT), dtype=jnp.float32)
    o2 = jax.block_until_ready(multilayer_forward(x2, params))
    r2 = reference_forward(x2, params)
    assert o2.shape == (70, 1)
    assert jnp.allclose(o2, r2, atol=1e-5, rtol=1e-5), "mismatch vs reference (70)"

    # Multi-step grid with a partial final block (rows=24, tm_rows=16, grid=2).
    x3 = jax.random.normal(kx3, (300, FEAT), dtype=jnp.float32)
    o3 = jax.block_until_ready(multilayer_forward(x3, params, tm=256))
    r3 = reference_forward(x3, params)
    assert o3.shape == (300, 1)
    assert jnp.allclose(o3, r3, atol=1e-5, rtol=1e-5), "mismatch vs reference (300)"

    print("KERNEL_OK")
</pallas_src>

<mosaic_0001>
module attributes {stable_mosaic.version = 11 : i64} {
  func.func @_mlp_kernel(%arg0: i32, %arg1: memref<8x128xf32, #tpu.memory_space<vmem>>, %arg2: memref<128x128xf32, #tpu.memory_space<vmem>>, %arg3: memref<128x128xf32, #tpu.memory_space<vmem>>, %arg4: memref<128x128xf32, #tpu.memory_space<vmem>>, %arg5: memref<128x16xf32, #tpu.memory_space<vmem>>, %arg6: memref<8x128xf32, #tpu.memory_space<vmem>>, %arg7: memref<1xf32, #tpu.memory_space<smem>>, %arg8: memref<8x16xf32, #tpu.memory_space<vmem>>) attributes {dimension_semantics = [#tpu.dimension_semantics<parallel>], iteration_bounds = array<i64: 1>, scalar_prefetch = 0 : i64, scratch_operands = 0 : i64, tpu.core_type = #tpu.core_type<tc>, window_params = [{transform_indices = @transform_0, window_bounds = array<i64: 8, 128>}, {pipeline_mode = #tpu.pipeline_mode<synchronous>, transform_indices = @transform_1, window_bounds = array<i64: 128, 128>}, {pipeline_mode = #tpu.pipeline_mode<synchronous>, transform_indices = @transform_2, window_bounds = array<i64: 128, 128>}, {pipeline_mode = #tpu.pipeline_mode<synchronous>, transform_indices = @transform_3, window_bounds = array<i64: 128, 128>}, {pipeline_mode = #tpu.pipeline_mode<synchronous>, transform_indices = @transform_4, window_bounds = array<i64: 128, 16>}, {pipeline_mode = #tpu.pipeline_mode<synchronous>, transform_indices = @transform_5, window_bounds = array<i64: 8, 128>}, {transform_indices = @transform_6, window_bounds = array<i64: 1>}, {transform_indices = @transform_7, window_bounds = array<i64: 8, 16>}]} {
    %c0 = arith.constant 0 : index
    %c0_0 = arith.constant 0 : index
    %0 = vector.load %arg1[%c0, %c0_0] : memref<8x128xf32, #tpu.memory_space<vmem>>, vector<8x128xf32>
    %c0_1 = arith.constant 0 : index
    %c0_2 = arith.constant 0 : index
    %1 = vector.load %arg2[%c0_1, %c0_2] : memref<128x128xf32, #tpu.memory_space<vmem>>, vector<128x128xf32>
    %cst = arith.constant dense<0.000000e+00> : vector<8x128xf32>
    %2 = tpu.matmul %0, %1, %cst {dimension_numbers = #tpu.dot_dimension_numbers<[1], [0], [0], [1], [0, 0, 1, 1], [], []>} : vector<8x128xf32>, vector<128x128xf32>, vector<8x128xf32> -> vector<8x128xf32>
    %c0_3 = arith.constant 0 : index
    %c0_4 = arith.constant 0 : index
    %3 = vector.load %arg6[%c0_3, %c0_4] : memref<8x128xf32, #tpu.memory_space<vmem>>, vector<1x128xf32>
    %4 = vector.broadcast %3 : vector<1x128xf32> to vector<8x128xf32>
    %5 = arith.addf %2, %4 : vector<8x128xf32>
    %cst_5 = arith.constant 0.000000e+00 : f32
    %6 = vector.broadcast %cst_5 : f32 to vector<8x128xf32>
    %7 = arith.subf %6, %5 : vector<8x128xf32>
    %cst_6 = arith.constant 0.000000e+00 : f32
    %8 = vector.broadcast %cst_6 : f32 to vector<8x128xf32>
    %9 = arith.maximumf %7, %8 : vector<8x128xf32>
    %10 = vector.broadcast %cst_6 : f32 to vector<8x128xf32>
    %11 = arith.subf %7, %10 : vector<8x128xf32>
    %12 = arith.cmpf one, %11, %11 : vector<8x128xf32>
    %13 = vector.broadcast %cst_6 : f32 to vector<8x128xf32>
    %14 = arith.addf %7, %13 : vector<8x128xf32>
    %15 = math.absf %11 : vector<8x128xf32>
    %cst_7 = arith.constant 0.000000e+00 : f32
    %16 = vector.broadcast %cst_7 : f32 to vector<8x128xf32>
    %17 = arith.subf %16, %15 : vector<8x128xf32>
    %18 = math.exp %17 : vector<8x128xf32>
    %19 = math.log1p %18 : vector<8x128xf32>
    %20 = arith.addf %9, %19 : vector<8x128xf32>
    %21 = arith.select %12, %14, %20 : vector<8x128xi1>, vector<8x128xf32>
    %cst_8 = arith.constant 0.000000e+00 : f32
    %22 = vector.broadcast %cst_8 : f32 to vector<8x128xf32>
    %23 = arith.subf %22, %21 : vector<8x128xf32>
    %c0_9 = arith.constant 0 : index
    %c0_10 = arith.constant 0 : index
    %24 = vector.load %arg3[%c0_9, %c0_10] : memref<128x128xf32, #tpu.memory_space<vmem>>, vector<128x128xf32>
    %cst_11 = arith.constant dense<0.000000e+00> : vector<8x128xf32>
    %25 = tpu.matmul %23, %24, %cst_11 {dimension_numbers = #tpu.dot_dimension_numbers<[1], [0], [0], [1], [0, 0, 1, 1], [], []>} : vector<8x128xf32>, vector<128x128xf32>, vector<8x128xf32> -> vector<8x128xf32>
    %c1 = arith.constant 1 : index
    %c0_12 = arith.constant 0 : index
    %26 = vector.load %arg6[%c1, %c0_12] : memref<8x128xf32, #tpu.memory_space<vmem>>, vector<1x128xf32>
    %27 = vector.broadcast %26 : vector<1x128xf32> to vector<8x128xf32>
    %28 = arith.addf %25, %27 : vector<8x128xf32>
    %cst_13 = arith.constant 0.000000e+00 : f32
    %29 = vector.broadcast %cst_13 : f32 to vector<8x128xf32>
    %30 = arith.subf %29, %28 : vector<8x128xf32>
    %cst_14 = arith.constant 0.000000e+00 : f32
    %31 = vector.broadcast %cst_14 : f32 to vector<8x128xf32>
    %32 = arith.maximumf %30, %31 : vector<8x128xf32>
    %33 = vector.broadcast %cst_14 : f32 to vector<8x128xf32>
    %34 = arith.subf %30, %33 : vector<8x128xf32>
    %35 = arith.cmpf one, %34, %34 : vector<8x128xf32>
    %36 = vector.broadcast %cst_14 : f32 to vector<8x128xf32>
    %37 = arith.addf %30, %36 : vector<8x128xf32>
    %38 = math.absf %34 : vector<8x128xf32>
    %cst_15 = arith.constant 0.000000e+00 : f32
    %39 = vector.broadcast %cst_15 : f32 to vector<8x128xf32>
    %40 = arith.subf %39, %38 : vector<8x128xf32>
    %41 = math.exp %40 : vector<8x128xf32>
    %42 = math.log1p %41 : vector<8x128xf32>
    %43 = arith.addf %32, %42 : vector<8x128xf32>
    %44 = arith.select %35, %37, %43 : vector<8x128xi1>, vector<8x128xf32>
    %cst_16 = arith.constant 0.000000e+00 : f32
    %45 = vector.broadcast %cst_16 : f32 to vector<8x128xf32>
    %46 = arith.subf %45, %44 : vector<8x128xf32>
    %c0_17 = arith.constant 0 : index
    %c0_18 = arith.constant 0 : index
    %47 = vector.load %arg4[%c0_17, %c0_18] : memref<128x128xf32, #tpu.memory_space<vmem>>, vector<128x128xf32>
    %cst_19 = arith.constant dense<0.000000e+00> : vector<8x128xf32>
    %48 = tpu.matmul %46, %47, %cst_19 {dimension_numbers = #tpu.dot_dimension_numbers<[1], [0], [0], [1], [0, 0, 1, 1], [], []>} : vector<8x128xf32>, vector<128x128xf32>, vector<8x128xf32> -> vector<8x128xf32>
    %c2 = arith.constant 2 : index
    %c0_20 = arith.constant 0 : index
    %49 = vector.load %arg6[%c2, %c0_20] : memref<8x128xf32, #tpu.memory_space<vmem>>, vector<1x128xf32>
    %50 = vector.broadcast %49 : vector<1x128xf32> to vector<8x128xf32>
    %51 = arith.addf %48, %50 : vector<8x128xf32>
    %cst_21 = arith.constant 0.000000e+00 : f32
    %52 = vector.broadcast %cst_21 : f32 to vector<8x128xf32>
    %53 = arith.subf %52, %51 : vector<8x128xf32>
    %cst_22 = arith.constant 0.000000e+00 : f32
    %54 = vector.broadcast %cst_22 : f32 to vector<8x128xf32>
    %55 = arith.maximumf %53, %54 : vector<8x128xf32>
    %56 = vector.broadcast %cst_22 : f32 to vector<8x128xf32>
    %57 = arith.subf %53, %56 : vector<8x128xf32>
    %58 = arith.cmpf one, %57, %57 : vector<8x128xf32>
    %59 = vector.broadcast %cst_22 : f32 to vector<8x128xf32>
    %60 = arith.addf %53, %59 : vector<8x128xf32>
    %61 = math.absf %57 : vector<8x128xf32>
    %cst_23 = arith.constant 0.000000e+00 : f32
    %62 = vector.broadcast %cst_23 : f32 to vector<8x128xf32>
    %63 = arith.subf %62, %61 : vector<8x128xf32>
    %64 = math.exp %63 : vector<8x128xf32>
    %65 = math.log1p %64 : vector<8x128xf32>
    %66 = arith.addf %55, %65 : vector<8x128xf32>
    %67 = arith.select %58, %60, %66 : vector<8x128xi1>, vector<8x128xf32>
    %cst_24 = arith.constant 0.000000e+00 : f32
    %68 = vector.broadcast %cst_24 : f32 to vector<8x128xf32>
    %69 = arith.subf %68, %67 : vector<8x128xf32>
    %c0_25 = arith.constant 0 : index
    %c0_26 = arith.constant 0 : index
    %70 = vector.load %arg5[%c0_25, %c0_26] : memref<128x16xf32, #tpu.memory_space<vmem>>, vector<128x16xf32>
    %cst_27 = arith.constant dense<0.000000e+00> : vector<8x16xf32>
    %71 = tpu.matmul %69, %70, %cst_27 {dimension_numbers = #tpu.dot_dimension_numbers<[1], [0], [0], [1], [0, 0, 1, 1], [], []>} : vector<8x128xf32>, vector<128x16xf32>, vector<8x16xf32> -> vector<8x16xf32>
    %c0_28 = arith.constant 0 : index
    %72 = memref.load %arg7[%c0_28] : memref<1xf32, #tpu.memory_space<smem>>
    %73 = vector.broadcast %72 : f32 to vector<8x16xf32>
    %74 = arith.addf %71, %73 : vector<8x16xf32>
    %75 = arith.negf %74 : vector<8x16xf32>
    %76 = math.exp %75 : vector<8x16xf32>
    %cst_29 = arith.constant 1.000000e+00 : f32
    %77 = vector.broadcast %cst_29 : f32 to vector<8x16xf32>
    %78 = arith.addf %77, %76 : vector<8x16xf32>
    %79 = arith.divf %77, %78 : vector<8x16xf32>
    %c0_30 = arith.constant 0 : index
    %c0_31 = arith.constant 0 : index
    %80 = vector.load %arg8[%c0_30, %c0_31] : memref<8x16xf32, #tpu.memory_space<vmem>>, vector<8x16xf32>
    tpu.vector_store %arg8[%c0_30, %c0_31], %79 {strides = array<i32>} : memref<8x16xf32, #tpu.memory_space<vmem>>, vector<8x16xf32>,
    return
  }
  func.func @transform_0(%arg0: i32) -> (i32, i32) {
    %c0_i32 = arith.constant 0 : i32
    %c0_i32_0 = arith.constant 0 : i32
    return %arg0, %c0_i32 : i32, i32
  }
  func.func @transform_1(%arg0: i32) -> (i32, i32) {
    %c0_i32 = arith.constant 0 : i32
    %c0_i32_0 = arith.constant 0 : i32
    %c0_i32_1 = arith.constant 0 : i32
    return %c0_i32, %c0_i32_0 : i32, i32
  }
  func.func @transform_2(%arg0: i32) -> (i32, i32) {
    %c0_i32 = arith.constant 0 : i32
    %c0_i32_0 = arith.constant 0 : i32
    %c0_i32_1 = arith.constant 0 : i32
    return %c0_i32, %c0_i32_0 : i32, i32
  }
  func.func @transform_3(%arg0: i32) -> (i32, i32) {
    %c0_i32 = arith.constant 0 : i32
    %c0_i32_0 = arith.constant 0 : i32
    %c0_i32_1 = arith.constant 0 : i32
    return %c0_i32, %c0_i32_0 : i32, i32
  }
  func.func @transform_4(%arg0: i32) -> (i32, i32) {
    %c0_i32 = arith.constant 0 : i32
    %c0_i32_0 = arith.constant 0 : i32
    %c0_i32_1 = arith.constant 0 : i32
    return %c0_i32, %c0_i32_0 : i32, i32
  }
  func.func @transform_5(%arg0: i32) -> (i32, i32) {
    %c0_i32 = arith.constant 0 : i32
    %c0_i32_0 = arith.constant 0 : i32
    %c0_i32_1 = arith.constant 0 : i32
    return %c0_i32, %c0_i32_0 : i32, i32
  }
  func.func @transform_6(%arg0: i32) -> i32 {
    %c0_i32 = arith.constant 0 : i32
    %c0_i32_0 = arith.constant 0 : i32
    return %c0_i32 : i32
  }
  func.func @transform_7(%arg0: i32) -> (i32, i32) {
    %c0_i32 = arith.constant 0 : i32
    %c0_i32_0 = arith.constant 0 : i32
    return %arg0, %c0_i32 : i32, i32
  }
}

</mosaic_0001>

<llo_original>
// kernel: tpu_custom_call.1
$region0: #{tpu_custom_call.1}
  #allocation0 [shape = 'u32[]', space=smem, size = 0x4, offset = 0x4, fixed_abs, tag = 'smem constant byte address 0x4 - core index']
  #allocation1 [shape = 'u32[144,128]{1,0:T(1,128)}', space=vmem, size = 0x12000, scoped, tag = 'internal scratch']
  #allocation2 [shape = 'f32[1]{0:T(128)S(6)}', space=smem, size = 0x200, scoped, tag = 'scoped memory for tpu_custom_call.1']
  %s0 = inlined_call_operand.vmem [shape: f32[8,128], index: 0, kind: input, shape index: {}]
  %s1 = inlined_call_operand.vmem [shape: f32[128,128], index: 1, kind: input, shape index: {}]
  %s2 = inlined_call_operand.hbm [shape: f32[128,128], index: 2, kind: input, shape index: {}]
  %s3 = inlined_call_operand.hbm [shape: f32[128,128], index: 3, kind: input, shape index: {}]
  %s4 = inlined_call_operand.vmem [shape: f32[128,16], index: 4, kind: input, shape index: {}]
  %s5 = inlined_call_operand.vmem [shape: f32[8,128], index: 5, kind: input, shape index: {}]
  %s6 = inlined_call_operand.<no memory space> [shape: f32[1], index: 6, kind: input, shape index: {}]
  %s7 = inlined_call_operand.hbm [shape: f32[8,16], index: 7, kind: output, shape index: {}]
  %s8 = sld [smem:[#allocation0]]
  $region46: #{tpu_custom_call.1} parent=0
    _
  %s10 = ssub.s32 1, %s8
  %s11 = scalar_select 0, %s10, %s8
  %12 = sst [smem:[#allocation2]] %s6
  $region1: #{tpu_custom_call.1} parent=0
    #allocation3 [shape = 'u8[65536]{0}', space=vmem, size = 0x10000, scoped, tag = 'input window, operand 2, single buffered']
    #allocation4 [shape = 's32[1]{0}', space=sflag, size = 0x4, scoped, tag = 'scoped memory for tpu_custom_call.1']
    #allocation5 [shape = 's32[1]{0}', space=sflag, size = 0x4, scoped, tag = 'scoped memory for tpu_custom_call.1']
    #allocation6 [shape = 'u8[65536]{0}', space=vmem, size = 0x10000, scoped, tag = 'input window, operand 3, single buffered']
    #allocation7 [shape = 's32[1]{0}', space=sflag, size = 0x4, scoped, tag = 'scoped memory for tpu_custom_call.1']
    #allocation8 [shape = 'u8[4096]{0}', space=vmem, size = 0x1000, scoped, tag = 'output window, operand 0, single buffered']
    %13 = vsyncpa [#allocation4], 0
    %14 = vsyncpa [#allocation7], 0
    %15 = vsyncpa [#allocation5], 0
    // Predicated region
    $region2: #{tpu_custom_call.1} parent=1 // pred_check
      _
    $region3: #{tpu_custom_call.1} parent=1 // pred_check_branch
      %17 = sbr.rel (0) target = $region5
    $region4: #{tpu_custom_call.1} parent=1 // pred_region
      _
    $region5: #{tpu_custom_call.1} parent=1 // pred_fallthru
      _
    // Predicated region
    $region6: #{tpu_custom_call.1} parent=1 // pred_check
      _
    $region7: #{tpu_custom_call.1} parent=1 // pred_check_branch
      %19 = sbr.rel (0) target = $region9
    $region8: #{tpu_custom_call.1} parent=1 // pred_region
      _
    $region9: #{tpu_custom_call.1} parent=1 // pred_fallthru
      _
    // Predicated region
    $region10: #{tpu_custom_call.1} parent=1 // pred_check
      _
    $region11: #{tpu_custom_call.1} parent=1 // pred_check_branch
      %21 = sbr.rel (0) target = $region13
    $region12: #{tpu_custom_call.1} parent=1 // pred_region
      %s23 = ssub.s32 2048, 2048
      %24 = vsyncadd [#allocation4], %s23
      %s25 = sshll.u32 [#allocation3], 4
      %s26 = int_to_ptr.vmem [resolvable:$true] %s25
      %31 = dma.hbm_to_vmem [thread:$0]  %s2, 2048, %s26, [#allocation4], 128, 128, 8
    $region13: #{tpu_custom_call.1} parent=1 // pred_fallthru
      _
    // Predicated region
    $region14: #{tpu_custom_call.1} parent=1 // pred_check
      _
    $region15: #{tpu_custom_call.1} parent=1 // pred_check_branch
      %33 = sbr.rel (0) target = $region17
    $region16: #{tpu_custom_call.1} parent=1 // pred_region
      %s35 = ssub.s32 2048, 2048
      %36 = vsyncadd [#allocation7], %s35
      %s37 = sshll.u32 [#allocation6], 4
      %s38 = int_to_ptr.vmem [resolvable:$true] %s37
      %43 = dma.hbm_to_vmem [thread:$0]  %s3, 2048, %s38, [#allocation7], 128, 128, 8
    $region17: #{tpu_custom_call.1} parent=1 // pred_fallthru
      _
    // Predicated region
    $region18: #{tpu_custom_call.1} parent=1 // pred_check
      _
    $region19: #{tpu_custom_call.1} parent=1 // pred_check_branch
      %45 = sbr.rel (0) target = $region21
    $region20: #{tpu_custom_call.1} parent=1 // pred_region
      _
    $region21: #{tpu_custom_call.1} parent=1 // pred_fallthru
      _
    // Predicated region
    $region22: #{tpu_custom_call.1} parent=1 // pred_check
      _
    $region23: #{tpu_custom_call.1} parent=1 // pred_check_branch
      %47 = sbr.rel (0) target = $region25
    $region24: #{tpu_custom_call.1} parent=1 // pred_region
      _
    $region25: #{tpu_custom_call.1} parent=1 // pred_fallthru
      _
    // Predicated region
    $region26: #{tpu_custom_call.1} parent=1 // pred_check
      _
    $region27: #{tpu_custom_call.1} parent=1 // pred_check_branch
      %49 = sbr.rel (0) target = $region29
    $region28: #{tpu_custom_call.1} parent=1 // pred_region
      _
    $region29: #{tpu_custom_call.1} parent=1 // pred_fallthru
      _
    // Predicated region
    $region30: #{tpu_custom_call.1} parent=1 // pred_check
      _
    $region31: #{tpu_custom_call.1} parent=1 // pred_check_branch
      %51 = sbr.rel (0) target = $region33
    $region32: #{tpu_custom_call.1} parent=1 // pred_region
      %52 = dma.done [#allocation4], 2048
    $region33: #{tpu_custom_call.1} parent=1 // pred_fallthru
      _
    // Predicated region
    $region34: #{tpu_custom_call.1} parent=1 // pred_check
      _
    $region35: #{tpu_custom_call.1} parent=1 // pred_check_branch
      %54 = sbr.rel (0) target = $region37
    $region36: #{tpu_custom_call.1} parent=1 // pred_region
      %55 = dma.done [#allocation7], 2048
    $region37: #{tpu_custom_call.1} parent=1 // pred_fallthru
      _
    %v56 = vld [vmem:[%s0] sm:$0xff]
    %v57 = vld [vmem:[%s1] sm:$0xff]
    %v58 = vld [vmem:[%s1 + $0x8] sm:$0xff]
    %v59 = vld [vmem:[%s1 + $0x10] sm:$0xff]
    %v60 = vld [vmem:[%s1 + $0x18] sm:$0xff]
    %v61 = vld [vmem:[%s1 + $0x20] sm:$0xff]
    %v62 = vld [vmem:[%s1 + $0x28] sm:$0xff]
    %v63 = vld [vmem:[%s1 + $0x30] sm:$0xff]
    %v64 = vld [vmem:[%s1 + $0x38] sm:$0xff]
    %v65 = vld [vmem:[%s1 + $0x40] sm:$0xff]
    %v66 = vld [vmem:[%s1 + $0x48] sm:$0xff]
    %v67 = vld [vmem:[%s1 + $0x50] sm:$0xff]
    %v68 = vld [vmem:[%s1 + $0x58] sm:$0xff]
    %v69 = vld [vmem:[%s1 + $0x60] sm:$0xff]
    %v70 = vld [vmem:[%s1 + $0x68] sm:$0xff]
    %v71 = vld [vmem:[%s1 + $0x70] sm:$0xff]
    %v72 = vld [vmem:[%s1 + $0x78] sm:$0xff]
    %v73 = vld [vmem:[%s5] sm:$0x1]
    %v74 = vlaneseq
    %v75 = vshrl.u32 %v74, 7
    %v76 = vsub.s32 0, %v75
    %v77 = vrot.slane %v73, %v76
    %78 = vmatprep.subr.mxu0 0.0
    %79 = vmatpush1.msra.mxu0 %v57
    %80 = vmatprep.subr.mxu0 0.0
    %81 = vmatpush1.msra.mxu0 %v58
    %82 = vmatprep.subr.mxu0 0.0
    %83 = vmatpush1.msra.mxu0 %v59
    %84 = vmatprep.subr.mxu0 0.0
    %85 = vmatpush1.msra.mxu0 %v60
    %86 = vmatprep.subr.mxu0 0.0
    %87 = vmatpush1.msra.mxu0 %v61
    %88 = vmatprep.subr.mxu0 0.0
    %89 = vmatpush1.msra.mxu0 %v62
    %90 = vmatprep.subr.mxu0 0.0
    %91 = vmatpush1.msra.mxu0 %v63
    %92 = vmatprep.subr.mxu0 0.0
    %93 = vmatpush1.msra.mxu0 %v64
    %94 = vmatprep.subr.mxu0 0.0
    %95 = vmatpush1.msra.mxu0 %v65
    %96 = vmatprep.subr.mxu0 0.0
    %97 = vmatpush1.msra.mxu0 %v66
    %98 = vmatprep.subr.mxu0 0.0
    %99 = vmatpush1.msra.mxu0 %v67
    %100 = vmatprep.subr.mxu0 0.0
    %101 = vmatpush1.msra.mxu0 %v68
    %102 = vmatprep.subr.mxu0 0.0
    %103 = vmatpush1.msra.mxu0 %v69
    %104 = vmatprep.subr.mxu0 0.0
    %105 = vmatpush1.msra.mxu0 %v70
    %106 = vmatprep.subr.mxu0 0.0
    %107 = vmatpush1.msra.mxu0 %v71
    %108 = vmatprep.subr.mxu0 0.0
    %109 = vmatpush1.msra.mxu0 %v72
    %110 = vmatprep.subr.mxu0 0.0
    %111 = vmatpush1.msra.mxu0 0.0
    %112 = vmatprep.subr.mxu0 0.0
    %113 = vmatpush1.msra.mxu0 0.0
    %114 = vmatprep.subr.mxu0 0.0
    %115 = vmatpush1.msra.mxu0 0.0
    %116 = vmatprep.subr.mxu0 0.0
    %117 = vmatpush1.msra.mxu0 0.0
    %118 = vmatprep.subr.mxu0 0.0
    %119 = vmatpush1.msra.mxu0 0.0
    %120 = vmatprep.subr.mxu0 0.0
    %121 = vmatpush1.msra.mxu0 0.0
    %122 = vmatprep.subr.mxu0 0.0
    %123 = vmatpush1.msra.mxu0 0.0
    %124 = vmatprep.subr.mxu0 0.0
    %125 = vmatpush1.msra.mxu0 0.0
    %126 = vmatprep.subr.mxu0 0.0
    %127 = vmatpush1.msra.mxu0 0.0
    %128 = vmatprep.subr.mxu0 0.0
    %129 = vmatpush1.msra.mxu0 0.0
    %130 = vmatprep.subr.mxu0 0.0
    %131 = vmatpush1.msra.mxu0 0.0
    %132 = vmatprep.subr.mxu0 0.0
    %133 = vmatpush1.msra.mxu0 0.0
    %134 = vmatprep.subr.mxu0 0.0
    %135 = vmatpush1.msra.mxu0 0.0
    %136 = vmatprep.subr.mxu0 0.0
    %137 = vmatpush1.msra.mxu0 0.0
    %138 = vmatprep.subr.mxu0 0.0
    %139 = vmatpush1.msra.mxu0 0.0
    %140 = vmatprep.subr.mxu0 0.0
    %141 = vmatpush1.msra.mxu0 0.0
    %142 = vmatprep.mubr.f32.mxu0 0.0
    %143 = vmatmul.mubr.f32.gmra.mrb[0].mxu0 %v56
    %v144 = vpop.f32.mrb[0].mxu0
    %v145 = vadd.f32 %v77, %v144
    %v146 = vpop.f32.mrb[0].mxu0
    %147 = vdwg.mxu0
    %v148 = vsub.f32 0.0, %v145
    %v149 = vmax.f32 %v148, 0.0
    %vm150 = vcmp.ne.f32.partialorder %v148, %v148
    %v151 = vadd.f32 %v148, 0.0
    %v152 = vand.u32 2147483647, %v148
    %v153 = vsub.f32 0.0, %v152
    %v154 = vmul.f32 %v153, 1.442695
    %v155 = vpow.pop %v154
    %v156 = vadd.f32 %v155, 1.0
    %v157 = vlog2.pop %v156
    %v158 = vmul.f32 %v157, 0.6931472
    %v159 = vmul.f32 -0.5, %v155
    %v160 = vadd.f32 %v159, 1.0
    %v161 = vmul.f32 %v160, %v155
    %v162 = vand.u32 2147483647, %v155
    %vm163 = vcmp.lt.f32.partialorder %v162, 0.0004427343
    %v164 = vsel %vm163, %v161, %v158
    %v165 = vadd.f32 %v149, %v164
    %v166 = vsel %vm150, %v151, %v165
    %v167 = vsub.f32 0.0, %v166
    %v168 = vld [vmem:[#allocation3] sm:$0xff]
    %v169 = vld [vmem:[#allocation3 + $0x8] sm:$0xff]
    %v170 = vld [vmem:[#allocation3 + $0x10] sm:$0xff]
    %v171 = vld [vmem:[#allocation3 + $0x18] sm:$0xff]
    %v172 = vld [vmem:[#allocation3 + $0x20] sm:$0xff]
    %v173 = vld [vmem:[#allocation3 + $0x28] sm:$0xff]
    %v174 = vld [vmem:[#allocation3 + $0x30] sm:$0xff]
    %v175 = vld [vmem:[#allocation3 + $0x38] sm:$0xff]
    %v176 = vld [vmem:[#allocation3 + $0x40] sm:$0xff]
    %v177 = vld [vmem:[#allocation3 + $0x48] sm:$0xff]
    %v178 = vld [vmem:[#allocation3 + $0x50] sm:$0xff]
    %v179 = vld [vmem:[#allocation3 + $0x58] sm:$0xff]
    %v180 = vld [vmem:[#allocation3 + $0x60] sm:$0xff]
    %v181 = vld [vmem:[#allocation3 + $0x68] sm:$0xff]
    %v182 = vld [vmem:[#allocation3 + $0x70] sm:$0xff]
    %v183 = vld [vmem:[#allocation3 + $0x78] sm:$0xff]
    %v184 = vld [vmem:[%s5 + $0x1] sm:$0x1]
    %v185 = vlaneseq
    %v186 = vshrl.u32 %v185, 7
    %v187 = vsub.s32 0, %v186
    %v188 = vrot.slane %v184, %v187
    %189 = vmatprep.subr.mxu0 0.0
    %190 = vmatpush1.msra.mxu0 %v168
    %191 = vmatprep.subr.mxu0 0.0
    %192 = vmatpush1.msra.mxu0 %v169
    %193 = vmatprep.subr.mxu0 0.0
    %194 = vmatpush1.msra.mxu0 %v170
    %195 = vmatprep.subr.mxu0 0.0
    %196 = vmatpush1.msra.mxu0 %v171
    %197 = vmatprep.subr.mxu0 0.0
    %198 = vmatpush1.msra.mxu0 %v172
    %199 = vmatprep.subr.mxu0 0.0
    %200 = vmatpush1.msra.mxu0 %v173
    %201 = vmatprep.subr.mxu0 0.0
    %202 = vmatpush1.msra.mxu0 %v174
    %203 = vmatprep.subr.mxu0 0.0
    %204 = vmatpush1.msra.mxu0 %v175
    %205 = vmatprep.subr.mxu0 0.0
    %206 = vmatpush1.msra.mxu0 %v176
    %207 = vmatprep.subr.mxu0 0.0
    %208 = vmatpush1.msra.mxu0 %v177
    %209 = vmatprep.subr.mxu0 0.0
    %210 = vmatpush1.msra.mxu0 %v178
    %211 = vmatprep.subr.mxu0 0.0
    %212 = vmatpush1.msra.mxu0 %v179
    %213 = vmatprep.subr.mxu0 0.0
    %214 = vmatpush1.msra.mxu0 %v180
    %215 = vmatprep.subr.mxu0 0.0
    %216 = vmatpush1.msra.mxu0 %v181
    %217 = vmatprep.subr.mxu0 0.0
    %218 = vmatpush1.msra.mxu0 %v182
    %219 = vmatprep.subr.mxu0 0.0
    %220 = vmatpush1.msra.mxu0 %v183
    %221 = vmatprep.subr.mxu0 0.0
    %222 = vmatpush1.msra.mxu0 0.0
    %223 = vmatprep.subr.mxu0 0.0
    %224 = vmatpush1.msra.mxu0 0.0
    %225 = vmatprep.subr.mxu0 0.0
    %226 = vmatpush1.msra.mxu0 0.0
    %227 = vmatprep.subr.mxu0 0.0
    %228 = vmatpush1.msra.mxu0 0.0
    %229 = vmatprep.subr.mxu0 0.0
    %230 = vmatpush1.msra.mxu0 0.0
    %231 = vmatprep.subr.mxu0 0.0
    %232 = vmatpush1.msra.mxu0 0.0
    %233 = vmatprep.subr.mxu0 0.0
    %234 = vmatpush1.msra.mxu0 0.0
    %235 = vmatprep.subr.mxu0 0.0
    %236 = vmatpush1.msra.mxu0 0.0
    %237 = vmatprep.subr.mxu0 0.0
    %238 = vmatpush1.msra.mxu0 0.0
    %239 = vmatprep.subr.mxu0 0.0
    %240 = vmatpush1.msra.mxu0 0.0
    %241 = vmatprep.subr.mxu0 0.0
    %242 = vmatpush1.msra.mxu0 0.0
    %243 = vmatprep.subr.mxu0 0.0
    %244 = vmatpush1.msra.mxu0 0.0
    %245 = vmatprep.subr.mxu0 0.0
    %246 = vmatpush1.msra.mxu0 0.0
    %247 = vmatprep.subr.mxu0 0.0
    %248 = vmatpush1.msra.mxu0 0.0
    %249 = vmatprep.subr.mxu0 0.0
    %250 = vmatpush1.msra.mxu0 0.0
    %251 = vmatprep.subr.mxu0 0.0
    %252 = vmatpush1.msra.mxu0 0.0
    %253 = vmatprep.mubr.f32.mxu0 0.0
    %254 = vmatmul.mubr.f32.gmra.mrb[0].mxu0 %v167
    %v255 = vpop.f32.mrb[0].mxu0
    %v256 = vadd.f32 %v188, %v255
    %v257 = vpop.f32.mrb[0].mxu0
    %258 = vdwg.mxu0
    %v259 = vsub.f32 0.0, %v256
    %v260 = vmax.f32 %v259, 0.0
    %vm261 = vcmp.ne.f32.partialorder %v259, %v259
    %v262 = vadd.f32 %v259, 0.0
    %v263 = vand.u32 2147483647, %v259
    %v264 = vsub.f32 0.0, %v263
    %v265 = vmul.f32 %v264, 1.442695
    %v266 = vpow.pop %v265
    %v267 = vadd.f32 %v266, 1.0
    %v268 = vlog2.pop %v267
    %v269 = vmul.f32 %v268, 0.6931472
    %v270 = vmul.f32 -0.5, %v266
    %v271 = vadd.f32 %v270, 1.0
    %v272 = vmul.f32 %v271, %v266
    %v273 = vand.u32 2147483647, %v266
    %vm274 = vcmp.lt.f32.partialorder %v273, 0.0004427343
    %v275 = vsel %vm274, %v272, %v269
    %v276 = vadd.f32 %v260, %v275
    %v277 = vsel %vm261, %v262, %v276
    %v278 = vsub.f32 0.0, %v277
    %v279 = vld [vmem:[#allocation6] sm:$0xff]
    %v280 = vld [vmem:[#allocation6 + $0x8] sm:$0xff]
    %v281 = vld [vmem:[#allocation6 + $0x10] sm:$0xff]
    %v282 = vld [vmem:[#allocation6 + $0x18] sm:$0xff]
    %v283 = vld [vmem:[#allocation6 + $0x20] sm:$0xff]
    %v284 = vld [vmem:[#allocation6 + $0x28] sm:$0xff]
    %v285 = vld [vmem:[#allocation6 + $0x30] sm:$0xff]
    %v286 = vld [vmem:[#allocation6 + $0x38] sm:$0xff]
    %v287 = vld [vmem:[#allocation6 + $0x40] sm:$0xff]
    %v288 = vld [vmem:[#allocation6 + $0x48] sm:$0xff]
    %v289 = vld [vmem:[#allocation6 + $0x50] sm:$0xff]
    %v290 = vld [vmem:[#allocation6 + $0x58] sm:$0xff]
    %v291 = vld [vmem:[#allocation6 + $0x60] sm:$0xff]
    %v292 = vld [vmem:[#allocation6 + $0x68] sm:$0xff]
    %v293 = vld [vmem:[#allocation6 + $0x70] sm:$0xff]
    %v294 = vld [vmem:[#allocation6 + $0x78] sm:$0xff]
    %v295 = vld [vmem:[%s5 + $0x2] sm:$0x1]
    %v296 = vlaneseq
    %v297 = vshrl.u32 %v296, 7
    %v298 = vsub.s32 0, %v297
    %v299 = vrot.slane %v295, %v298
    %300 = vmatprep.subr.mxu0 0.0
    %301 = vmatpush1.msra.mxu0 %v279
    %302 = vmatprep.subr.mxu0 0.0
    %303 = vmatpush1.msra.mxu0 %v280
    %304 = vmatprep.subr.mxu0 0.0
    %305 = vmatpush1.msra.mxu0 %v281
    %306 = vmatprep.subr.mxu0 0.0
    %307 = vmatpush1.msra.mxu0 %v282
    %308 = vmatprep.subr.mxu0 0.0
    %309 = vmatpush1.msra.mxu0 %v283
    %310 = vmatprep.subr.mxu0 0.0
    %311 = vmatpush1.msra.mxu0 %v284
    %312 = vmatprep.subr.mxu0 0.0
    %313 = vmatpush1.msra.mxu0 %v285
    %314 = vmatprep.subr.mxu0 0.0
    %315 = vmatpush1.msra.mxu0 %v286
    %316 = vmatprep.subr.mxu0 0.0
    %317 = vmatpush1.msra.mxu0 %v287
    %318 = vmatprep.subr.mxu0 0.0
    %319 = vmatpush1.msra.mxu0 %v288
    %320 = vmatprep.subr.mxu0 0.0
    %321 = vmatpush1.msra.mxu0 %v289
    %322 = vmatprep.subr.mxu0 0.0
    %323 = vmatpush1.msra.mxu0 %v290
    %324 = vmatprep.subr.mxu0 0.0
    %325 = vmatpush1.msra.mxu0 %v291
    %326 = vmatprep.subr.mxu0 0.0
    %327 = vmatpush1.msra.mxu0 %v292
    %328 = vmatprep.subr.mxu0 0.0
    %329 = vmatpush1.msra.mxu0 %v293
    %330 = vmatprep.subr.mxu0 0.0
    %331 = vmatpush1.msra.mxu0 %v294
    %332 = vmatprep.subr.mxu0 0.0
    %333 = vmatpush1.msra.mxu0 0.0
    %334 = vmatprep.subr.mxu0 0.0
    %335 = vmatpush1.msra.mxu0 0.0
    %336 = vmatprep.subr.mxu0 0.0
    %337 = vmatpush1.msra.mxu0 0.0
    %338 = vmatprep.subr.mxu0 0.0
    %339 = vmatpush1.msra.mxu0 0.0
    %340 = vmatprep.subr.mxu0 0.0
    %341 = vmatpush1.msra.mxu0 0.0
    %342 = vmatprep.subr.mxu0 0.0
    %343 = vmatpush1.msra.mxu0 0.0
    %344 = vmatprep.subr.mxu0 0.0
    %345 = vmatpush1.msra.mxu0 0.0
    %346 = vmatprep.subr.mxu0 0.0
    %347 = vmatpush1.msra.mxu0 0.0
    %348 = vmatprep.subr.mxu0 0.0
    %349 = vmatpush1.msra.mxu0 0.0
    %350 = vmatprep.subr.mxu0 0.0
    %351 = vmatpush1.msra.mxu0 0.0
    %352 = vmatprep.subr.mxu0 0.0
    %353 = vmatpush1.msra.mxu0 0.0
    %354 = vmatprep.subr.mxu0 0.0
    %355 = vmatpush1.msra.mxu0 0.0
    %356 = vmatprep.subr.mxu0 0.0
    %357 = vmatpush1.msra.mxu0 0.0
    %358 = vmatprep.subr.mxu0 0.0
    %359 = vmatpush1.msra.mxu0 0.0
    %360 = vmatprep.subr.mxu0 0.0
    %361 = vmatpush1.msra.mxu0 0.0
    %362 = vmatprep.subr.mxu0 0.0
    %363 = vmatpush1.msra.mxu0 0.0
    %364 = vmatprep.mubr.f32.mxu0 0.0
    %365 = vmatmul.mubr.f32.gmra.mrb[0].mxu0 %v278
    %v366 = vpop.f32.mrb[0].mxu0
    %v367 = vadd.f32 %v299, %v366
    %v368 = vpop.f32.mrb[0].mxu0
    %369 = vdwg.mxu0
    %v370 = vsub.f32 0.0, %v367
    %v371 = vmax.f32 %v370, 0.0
    %vm372 = vcmp.ne.f32.partialorder %v370, %v370
    %v373 = vadd.f32 %v370, 0.0
    %v374 = vand.u32 2147483647, %v370
    %v375 = vsub.f32 0.0, %v374
    %v376 = vmul.f32 %v375, 1.442695
    %v377 = vpow.pop %v376
    %v378 = vadd.f32 %v377, 1.0
    %v379 = vlog2.pop %v378
    %v380 = vmul.f32 %v379, 0.6931472
    %v381 = vmul.f32 -0.5, %v377
    %v382 = vadd.f32 %v381, 1.0
    %v383 = vmul.f32 %v382, %v377
    %v384 = vand.u32 2147483647, %v377
    %vm385 = vcmp.lt.f32.partialorder %v384, 0.0004427343
    %v386 = vsel %vm385, %v383, %v380
    %v387 = vadd.f32 %v371, %v386
    %v388 = vsel %vm372, %v373, %v387
    %v389 = vsub.f32 0.0, %v388
    %v390 = vld [vmem:[%s4] sm:$0xff]
    %v391 = vld [vmem:[%s4 + $0x8] sm:$0xff]
    %v392 = vld [vmem:[%s4 + $0x10] sm:$0xff]
    %v393 = vld [vmem:[%s4 + $0x18] sm:$0xff]
    %v394 = vld [vmem:[%s4 + $0x20] sm:$0xff]
    %v395 = vld [vmem:[%s4 + $0x28] sm:$0xff]
    %v396 = vld [vmem:[%s4 + $0x30] sm:$0xff]
    %v397 = vld [vmem:[%s4 + $0x38] sm:$0xff]
    %v398 = vld [vmem:[%s4 + $0x40] sm:$0xff]
    %v399 = vld [vmem:[%s4 + $0x48] sm:$0xff]
    %v400 = vld [vmem:[%s4 + $0x50] sm:$0xff]
    %v401 = vld [vmem:[%s4 + $0x58] sm:$0xff]
    %v402 = vld [vmem:[%s4 + $0x60] sm:$0xff]
    %v403 = vld [vmem:[%s4 + $0x68] sm:$0xff]
    %v404 = vld [vmem:[%s4 + $0x70] sm:$0xff]
    %v405 = vld [vmem:[%s4 + $0x78] sm:$0xff]
    %s406 = sld [smem:[#allocation2]]
    %v407 = vstv %s406
    %408 = vmatprep.subr.mxu0 0.0
    %409 = vmatpush1.msra.mxu0 %v390
    %410 = vmatprep.subr.mxu0 0.0
    %411 = vmatpush1.msra.mxu0 %v391
    %412 = vmatprep.subr.mxu0 0.0
    %413 = vmatpush1.msra.mxu0 %v392
    %414 = vmatprep.subr.mxu0 0.0
    %415 = vmatpush1.msra.mxu0 %v393
    %416 = vmatprep.subr.mxu0 0.0
    %417 = vmatpush1.msra.mxu0 %v394
    %418 = vmatprep.subr.mxu0 0.0
    %419 = vmatpush1.msra.mxu0 %v395
    %420 = vmatprep.subr.mxu0 0.0
    %421 = vmatpush1.msra.mxu0 %v396
    %422 = vmatprep.subr.mxu0 0.0
    %423 = vmatpush1.msra.mxu0 %v397
    %424 = vmatprep.subr.mxu0 0.0
    %425 = vmatpush1.msra.mxu0 %v398
    %426 = vmatprep.subr.mxu0 0.0
    %427 = vmatpush1.msra.mxu0 %v399
    %428 = vmatprep.subr.mxu0 0.0
    %429 = vmatpush1.msra.mxu0 %v400
    %430 = vmatprep.subr.mxu0 0.0
    %431 = vmatpush1.msra.mxu0 %v401
    %432 = vmatprep.subr.mxu0 0.0
    %433 = vmatpush1.msra.mxu0 %v402
    %434 = vmatprep.subr.mxu0 0.0
    %435 = vmatpush1.msra.mxu0 %v403
    %436 = vmatprep.subr.mxu0 0.0
    %437 = vmatpush1.msra.mxu0 %v404
    %438 = vmatprep.subr.mxu0 0.0
    %439 = vmatpush1.msra.mxu0 %v405
    %440 = vmatprep.subr.mxu0 0.0
    %441 = vmatpush1.msra.mxu0 0.0
    %442 = vmatprep.subr.mxu0 0.0
    %443 = vmatpush1.msra.mxu0 0.0
    %444 = vmatprep.subr.mxu0 0.0
    %445 = vmatpush1.msra.mxu0 0.0
    %446 = vmatprep.subr.mxu0 0.0
    %447 = vmatpush1.msra.mxu0 0.0
    %448 = vmatprep.subr.mxu0 0.0
    %449 = vmatpush1.msra.mxu0 0.0
    %450 = vmatprep.subr.mxu0 0.0
    %451 = vmatpush1.msra.mxu0 0.0
    %452 = vmatprep.subr.mxu0 0.0
    %453 = vmatpush1.msra.mxu0 0.0
    %454 = vmatprep.subr.mxu0 0.0
    %455 = vmatpush1.msra.mxu0 0.0
    %456 = vmatprep.subr.mxu0 0.0
    %457 = vmatpush1.msra.mxu0 0.0
    %458 = vmatprep.subr.mxu0 0.0
    %459 = vmatpush1.msra.mxu0 0.0
    %460 = vmatprep.subr.mxu0 0.0
    %461 = vmatpush1.msra.mxu0 0.0
    %462 = vmatprep.subr.mxu0 0.0
    %463 = vmatpush1.msra.mxu0 0.0
    %464 = vmatprep.subr.mxu0 0.0
    %465 = vmatpush1.msra.mxu0 0.0
    %466 = vmatprep.subr.mxu0 0.0
    %467 = vmatpush1.msra.mxu0 0.0
    %468 = vmatprep.subr.mxu0 0.0
    %469 = vmatpush1.msra.mxu0 0.0
    %470 = vmatprep.subr.mxu0 0.0
    %471 = vmatpush1.msra.mxu0 0.0
    %472 = vmatprep.mubr.f32.mxu0 0.0
    %473 = vmatmul.mubr.f32.gmra.mrb[0].mxu0 %v389
    %v474 = vpop.f32.mrb[0].mxu0
    %v475 = vadd.f32 %v407, %v474
    %v476 = vpop.f32.mrb[0].mxu0
    %477 = vdwg.mxu0
    %v478 = vxor.u32 %v475, 2147483648
    %v479 = vmul.f32 %v478, 1.442695
    %v480 = vpow.pop %v479
    %v481 = vadd.f32 %v480, 1.0
    %v482 = vrcp.pop %v481
    %v483 = vmul.f32 1.0, %v482
    %vm484 = vcmask 130048
    %485 = vst.msk [vmem:[#allocation8] sm:$0xff] %vm484, %v483
    // Predicated region
    $region38: #{tpu_custom_call.1} parent=1 // pred_check
      _
    $region39: #{tpu_custom_call.1} parent=1 // pred_check_branch
      %487 = sbr.rel (0) target = $region41
    $region40: #{tpu_custom_call.1} parent=1 // pred_region
      %s489 = ssub.s32 128, 128
      %490 = vsyncadd [#allocation5], %s489
      %s492 = sshll.u32 [#allocation8], 4
      %s493 = int_to_ptr.vmem [resolvable:$true] %s492
      %495 = dma.vmem_to_hbm [thread:$0]  %s493, 128, %s7, [#allocation5]
    $region41: #{tpu_custom_call.1} parent=1 // pred_fallthru
      _
    // Predicated region
    $region42: #{tpu_custom_call.1} parent=1 // pred_check
      _
    $region43: #{tpu_custom_call.1} parent=1 // pred_check_branch
      %497 = sbr.rel (0) target = $region45
    $region44: #{tpu_custom_call.1} parent=1 // pred_region
      %498 = dma.done [#allocation5], 128
    $region45: #{tpu_custom_call.1} parent=1 // pred_fallthru
      _
    %499 = vsyncpa [#allocation4], 1
    %500 = vsyncpa [#allocation7], 1
    %501 = vsyncpa [#allocation5], 1

</llo_original>
